<compile_context>
chip_gen: v5e
topology: v5e:2x2
jax: 0.10.0
libtpu: 0.0.40
codegen_flags: <defaults>
</compile_context>

<pallas_src>
import math
import functools

import jax
import jax.numpy as jnp
from jax.experimental import pallas as pl
from jax.experimental.pallas import tpu as pltpu

GELU_C = math.sqrt(2.0 / math.pi)


def _cdiv(a, b):
    return -(-a // b)


def _round_up(n, m):
    return ((n + m - 1) // m) * m


def _gelu_new(u):
    # GPT-2 "new" GELU (tanh approximation); tanh goes to the EUP slot.
    return 0.5 * u * (1.0 + jnp.tanh(GELU_C * (u + 0.044715 * (u * u * u))))


# ----------------------- Path A: weights resident in VMEM -----------------------
def _ffn_kernel_resident(x_ref, g_ref, be_ref, wfc_ref, bfc_ref, wpr_ref, bpr_ref,
                         o_ref, *, eps, matmul_dtype):
    x = x_ref[...].astype(jnp.float32)                        # (tm, H)

    # LayerNorm (biased variance, like torch.nn.LayerNorm)
    mean = jnp.mean(x, axis=-1, keepdims=True)
    xc = x - mean
    var = jnp.mean(xc * xc, axis=-1, keepdims=True)
    xn = xc * jax.lax.rsqrt(var + eps)
    h = xn * g_ref[...] + be_ref[...]

    # c_fc -> gelu_new -> c_proj (bf16 MXU operands, f32 accumulation)
    u = jnp.dot(h.astype(matmul_dtype), wfc_ref[...],
                preferred_element_type=jnp.float32) + bfc_ref[...]
    a = _gelu_new(u)
    y = jnp.dot(a.astype(matmul_dtype), wpr_ref[...],
                preferred_element_type=jnp.float32) + bpr_ref[...]

    # dropout (eval: identity) + residual
    o_ref[...] = (x + y).astype(o_ref.dtype)


# ------------------- Path B: intermediate dimension (I) tiled -------------------
def _ffn_kernel_ktiled(x_ref, g_ref, be_ref, bpr_ref, wfc_ref, bfc_ref, wpr_ref,
                       o_ref, h_ref, acc_ref, *, eps, matmul_dtype):
    k = pl.program_id(1)

    @pl.when(k == 0)
    def _():
        x = x_ref[...].astype(jnp.float32)
        mean = jnp.mean(x, axis=-1, keepdims=True)
        xc = x - mean
        var = jnp.mean(xc * xc, axis=-1, keepdims=True)
        xn = xc * jax.lax.rsqrt(var + eps)
        h = xn * g_ref[...] + be_ref[...]
        h_ref[...] = h.astype(matmul_dtype)                   # LN output, bf16 scratch
        acc_ref[...] = jnp.zeros_like(acc_ref)

    # Slab of the intermediate dim: only (tm, tI) of u/a is live.
    u = jnp.dot(h_ref[...], wfc_ref[...],
                preferred_element_type=jnp.float32) + bfc_ref[...]
    a = _gelu_new(u)
    acc_ref[...] += jnp.dot(a.astype(matmul_dtype), wpr_ref[...],
                            preferred_element_type=jnp.float32)

    @pl.when(k == pl.num_programs(1) - 1)
    def _():
        y = acc_ref[...] + bpr_ref[...]
        o_ref[...] = (x_ref[...].astype(jnp.float32) + y).astype(o_ref.dtype)


def jadio_feed_forward(x, gamma, beta, w_fc, b_fc, w_proj, b_proj,
                       *, eps=1e-5, tm_max=256, tI_max=2048,
                       matmul_dtype=jnp.bfloat16, force_ktiled=False):
    """x: (B, S, H) -> (B, S, H). w_fc: (H, I), w_proj: (I, H)."""
    B, S, H = x.shape
    I = w_fc.shape[1]
    M = B * S
    x2 = x.reshape(M, H)

    mm_bytes = jnp.dtype(matmul_dtype).itemsize
    x_bytes = jnp.dtype(x.dtype).itemsize

    # Pre-cast weights once at param-prep time if possible; only cast here if needed.
    wfc = w_fc if w_fc.dtype == matmul_dtype else w_fc.astype(matmul_dtype)
    wpr = w_proj if w_proj.dtype == matmul_dtype else w_proj.astype(matmul_dtype)
    gamma2 = gamma.reshape(1, H).astype(jnp.float32)
    beta2 = beta.reshape(1, H).astype(jnp.float32)
    bfc2 = b_fc.reshape(1, I).astype(jnp.float32)
    bpr2 = b_proj.reshape(1, H).astype(jnp.float32)

    # Physical per-core VMEM; fall back to the smallest current part (v7x, 64 MiB).
    try:
        vmem_cap = int(pltpu.get_tpu_info().vmem_capacity_bytes)
    except Exception:  # pragma: no cover - conservative fallback
        vmem_cap = 64 * 1024 * 1024

    # Row tile: fill the MXU M dim, but keep >= 2 row steps so the "parallel"
    # axis can be sharded across both TensorCores on v7x.
    tm = max(8, min(_round_up(tm_max, 8), _round_up(_cdiv(M, 2), 8)))
    n_rows = _cdiv(M, tm)

    weight_bytes = 2 * H * I * mm_bytes
    small_bytes = 8 * (H + I) * 4                     # gamma/beta/b_fc/b_proj (padded)
    io_bytes = 2 * tm * H * x_bytes * 2               # x + out tiles, double-buffered
    interm_bytes_A = (tm * H + 2 * tm * I) * 4        # h, u, a live f32 values
    need_A = weight_bytes + small_bytes + io_bytes + interm_bytes_A

    cost = pl.CostEstimate(
        flops=4 * M * H * I,
        transcendentals=M * I,
        bytes_accessed=2 * M * H * x_bytes + weight_bytes + (2 * H + I) * 4,
    )
    headroom = 1.25
    min_limit = 32 * 1024 * 1024

    use_resident = (not force_ktiled) and int(need_A * headroom) <= int(0.85 * vmem_cap)

    if use_resident:
        vmem_limit = min(max(int(need_A * headroom) + (8 << 20), min_limit),
                         int(0.95 * vmem_cap))
        resident = pl.BlockSpec(memory_space=pltpu.MemorySpace.VMEM)
        kernel = functools.partial(_ffn_kernel_resident, eps=eps,
                                   matmul_dtype=matmul_dtype)
        out = pl.pallas_call(
            kernel,
            out_shape=jax.ShapeDtypeStruct((M, H), x.dtype),
            grid_spec=pltpu.PrefetchScalarGridSpec(
                num_scalar_prefetch=0,
                grid=(n_rows,),
                in_specs=[
                    pl.BlockSpec((tm, H), lambda i: (i, 0)),   # x rows (pipelined)
                    resident,                                  # gamma
                    resident,                                  # beta
                    resident,                                  # w_fc (bf16)
                    resident,                                  # b_fc
                    resident,                                  # w_proj (bf16)
                    resident,                                  # b_proj
                ],
                out_specs=pl.BlockSpec((tm, H), lambda i: (i, 0)),
            ),
            compiler_params=pltpu.CompilerParams(
                dimension_semantics=("parallel",),
                vmem_limit_bytes=vmem_limit,
            ),
            cost_estimate=cost,
        )(x2, gamma2, beta2, wfc, bfc2, wpr, bpr2)
    else:
        # tI must divide I exactly (a ragged last K tile would pollute the
        # c_proj accumulator) and be a multiple of 128 (lane constraint), else
        # fall back to tI = I (single k step).
        tI = I
        if I % 128 == 0:
            start = max(128, min((tI_max // 128) * 128, I))
            for cand in range(start, 0, -128):
                if I % cand == 0:
                    tI = cand
                    break
        n_k = I // tI

        need_B = (2 * 2 * H * tI * mm_bytes          # w_fc / w_proj tiles, 2x buffered
                  + 2 * tI * 4 * 2                   # b_fc tiles
                  + io_bytes                         # x + out tiles
                  + tm * H * mm_bytes                # h scratch (bf16)
                  + tm * H * 4                       # acc scratch (f32)
                  + 2 * tm * tI * 4                  # u / a live f32 values
                  + small_bytes)
        vmem_limit = min(max(int(need_B * headroom) + (8 << 20), min_limit),
                         int(0.95 * vmem_cap))

        resident = pl.BlockSpec(memory_space=pltpu.MemorySpace.VMEM)
        kernel = functools.partial(_ffn_kernel_ktiled, eps=eps,
                                   matmul_dtype=matmul_dtype)
        out = pl.pallas_call(
            kernel,
            out_shape=jax.ShapeDtypeStruct((M, H), x.dtype),
            grid_spec=pltpu.PrefetchScalarGridSpec(
                num_scalar_prefetch=0,
                grid=(n_rows, n_k),
                in_specs=[
                    pl.BlockSpec((tm, H), lambda i, k: (i, 0)),   # x rows (resident over k)
                    resident,                                     # gamma
                    resident,                                     # beta
                    resident,                                     # b_proj
                    pl.BlockSpec((H, tI), lambda i, k: (0, k)),   # w_fc tile (streamed)
                    pl.BlockSpec((1, tI), lambda i, k: (0, k)),   # b_fc tile
                    pl.BlockSpec((tI, H), lambda i, k: (k, 0)),   # w_proj tile (streamed)
                ],
                out_specs=pl.BlockSpec((tm, H), lambda i, k: (i, 0)),
                scratch_shapes=[
                    pltpu.VMEM((tm, H), matmul_dtype),   # LN output h
                    pltpu.VMEM((tm, H), jnp.float32),    # c_proj accumulator
                ],
            ),
            compiler_params=pltpu.CompilerParams(
                dimension_semantics=("parallel", "arbitrary"),
                vmem_limit_bytes=vmem_limit,
            ),
            cost_estimate=cost,
        )(x2, gamma2, beta2, bpr2, wfc, bfc2, wpr)

    return out.reshape(B, S, H)


# ----------------------------- references -----------------------------
def _reference(x, gamma, beta, w_fc, b_fc, w_proj, b_proj,
               eps=1e-5, matmul_dtype=jnp.bfloat16):
    """Pure-JAX reference mirroring the kernel's bf16-matmul / f32-accum path."""
    xf = x.astype(jnp.float32)
    mean = jnp.mean(xf, axis=-1, keepdims=True)
    var = jnp.mean((xf - mean) ** 2, axis=-1, keepdims=True)
    h = (xf - mean) * jax.lax.rsqrt(var + eps) * gamma.astype(jnp.float32) \
        + beta.astype(jnp.float32)
    u = jnp.dot(h.astype(matmul_dtype), w_fc.astype(matmul_dtype),
                preferred_element_type=jnp.float32) + b_fc.astype(jnp.float32)
    a = 0.5 * u * (1.0 + jnp.tanh(GELU_C * (u + 0.044715 * u ** 3)))
    y = jnp.dot(a.astype(matmul_dtype), w_proj.astype(matmul_dtype),
                preferred_element_type=jnp.float32) + b_proj.astype(jnp.float32)
    return (xf + y).astype(x.dtype)


def _reference_f32(x, gamma, beta, w_fc, b_fc, w_proj, b_proj, eps=1e-5):
    xf = x.astype(jnp.float32)
    mean = jnp.mean(xf, axis=-1, keepdims=True)
    var = jnp.mean((xf - mean) ** 2, axis=-1, keepdims=True)
    h = (xf - mean) / jnp.sqrt(var + eps) * gamma.astype(jnp.float32) \
        + beta.astype(jnp.float32)
    u = h @ w_fc.astype(jnp.float32) + b_fc.astype(jnp.float32)
    a = 0.5 * u * (1.0 + jnp.tanh(GELU_C * (u + 0.044715 * u ** 3)))
    y = a @ w_proj.astype(jnp.float32) + b_proj.astype(jnp.float32)
    return (xf + y).astype(x.dtype)


if __name__ == "__main__":
    key = jax.random.PRNGKey(0)

    def make_case(key, B, S, H, I):
        kx, kfc, kpr = jax.random.split(key, 3)
        x = jax.random.normal(kx, (B, S, H), dtype=jnp.float32)
        # _init_weights: linear weights ~ N(0, 0.02), biases zero; LN gamma=1, beta=0.
        w_fc = 0.02 * jax.random.normal(kfc, (H, I), dtype=jnp.float32)
        b_fc = jnp.zeros((I,), dtype=jnp.float32)
        w_proj = 0.02 * jax.random.normal(kpr, (I, H), dtype=jnp.float32)
        b_proj = jnp.zeros((H,), dtype=jnp.float32)
        gamma = jnp.ones((H,), dtype=jnp.float32)
        beta = jnp.zeros((H,), dtype=jnp.float32)
        return x, gamma, beta, w_fc, b_fc, w_proj, b_proj

    # ---- Case 1: default shapes (H=32, I=4H), auto path (weights resident) ----
    B, S, H = 2, 8, 32
    I = 4 * H
    k1, k2 = jax.random.split(key)
    x, gamma, beta, w_fc, b_fc, w_proj, b_proj = make_case(k1, B, S, H, I)

    # Pre-cast weights to bf16 once (param-prep time), per perf feedback.
    w_fc_bf = w_fc.astype(jnp.bfloat16)
    w_proj_bf = w_proj.astype(jnp.bfloat16)

    out = jadio_feed_forward(x, gamma, beta, w_fc_bf, b_fc, w_proj_bf, b_proj)
    out = jax.block_until_ready(out)
    assert out.shape == (B, S, H)

    ref = _reference(x, gamma, beta, w_fc_bf, b_fc, w_proj_bf, b_proj)
    ref_f32 = _reference_f32(x, gamma, beta, w_fc, b_fc, w_proj, b_proj)
    assert jnp.allclose(out, ref, atol=2e-4, rtol=2e-4), "case1: mismatch vs bf16-path ref"
    assert jnp.allclose(out, ref_f32, atol=5e-3, rtol=5e-3), "case1: mismatch vs f32 ref"

    # ---- Case 2: force the I-tiled (streamed-weights) path, multi k-step ----
    B2, S2, H2, I2 = 2, 8, 128, 512
    x2, gamma2, beta2, w_fc2, b_fc2, w_proj2, b_proj2 = make_case(k2, B2, S2, H2, I2)
    w_fc2_bf = w_fc2.astype(jnp.bfloat16)
    w_proj2_bf = w_proj2.astype(jnp.bfloat16)

    out2 = jadio_feed_forward(x2, gamma2, beta2, w_fc2_bf, b_fc2, w_proj2_bf, b_proj2,
                              tI_max=128, force_ktiled=True)
    out2 = jax.block_until_ready(out2)
    assert out2.shape == (B2, S2, H2)

    ref2 = _reference(x2, gamma2, beta2, w_fc2_bf, b_fc2, w_proj2_bf, b_proj2)
    ref2_f32 = _reference_f32(x2, gamma2, beta2, w_fc2, b_fc2, w_proj2, b_proj2)
    assert jnp.allclose(out2, ref2, atol=2e-4, rtol=2e-4), "case2: mismatch vs bf16-path ref"
    assert jnp.allclose(out2, ref2_f32, atol=5e-3, rtol=5e-3), "case2: mismatch vs f32 ref"

    print("KERNEL_OK")
</pallas_src>

<mosaic_0001>
module attributes {stable_mosaic.version = 11 : i64} {
  func.func @_ffn_kernel_resident(%arg0: i32, %arg1: memref<8x32xf32, #tpu.memory_space<vmem>>, %arg2: memref<1x32xf32, #tpu.memory_space<vmem>>, %arg3: memref<1x32xf32, #tpu.memory_space<vmem>>, %arg4: memref<32x128xbf16, #tpu.memory_space<vmem>>, %arg5: memref<1x128xf32, #tpu.memory_space<vmem>>, %arg6: memref<128x32xbf16, #tpu.memory_space<vmem>>, %arg7: memref<1x32xf32, #tpu.memory_space<vmem>>, %arg8: memref<8x32xf32, #tpu.memory_space<vmem>>) attributes {dimension_semantics = [#tpu.dimension_semantics<parallel>], iteration_bounds = array<i64: 2>, scalar_prefetch = 0 : i64, scratch_operands = 0 : i64, tpu.core_type = #tpu.core_type<tc>, window_params = [{transform_indices = @transform_0, window_bounds = array<i64: 8, 32>}, {pipeline_mode = #tpu.pipeline_mode<synchronous>, transform_indices = @transform_1, window_bounds = array<i64: 1, 32>}, {pipeline_mode = #tpu.pipeline_mode<synchronous>, transform_indices = @transform_2, window_bounds = array<i64: 1, 32>}, {pipeline_mode = #tpu.pipeline_mode<synchronous>, transform_indices = @transform_3, window_bounds = array<i64: 32, 128>}, {pipeline_mode = #tpu.pipeline_mode<synchronous>, transform_indices = @transform_4, window_bounds = array<i64: 1, 128>}, {pipeline_mode = #tpu.pipeline_mode<synchronous>, transform_indices = @transform_5, window_bounds = array<i64: 128, 32>}, {pipeline_mode = #tpu.pipeline_mode<synchronous>, transform_indices = @transform_6, window_bounds = array<i64: 1, 32>}, {transform_indices = @transform_7, window_bounds = array<i64: 8, 32>}]} {
    %c0 = arith.constant 0 : index
    %c0_0 = arith.constant 0 : index
    %0 = vector.load %arg1[%c0, %c0_0] : memref<8x32xf32, #tpu.memory_space<vmem>>, vector<8x32xf32>
    %cst = arith.constant dense<0.000000e+00> : vector<8xf32>
    %1 = vector.multi_reduction <add>, %0, %cst [1] : vector<8x32xf32> to vector<8xf32>
    %2 = vector.shape_cast %1 : vector<8xf32> to vector<8x1xf32>
    %cst_1 = arith.constant 3.200000e+01 : f32
    %3 = vector.broadcast %cst_1 : f32 to vector<8x1xf32>
    %4 = arith.divf %2, %3 : vector<8x1xf32>
    %5 = vector.broadcast %4 : vector<8x1xf32> to vector<8x32xf32>
    %6 = arith.subf %0, %5 : vector<8x32xf32>
    %7 = arith.mulf %6, %6 : vector<8x32xf32>
    %cst_2 = arith.constant dense<0.000000e+00> : vector<8xf32>
    %8 = vector.multi_reduction <add>, %7, %cst_2 [1] : vector<8x32xf32> to vector<8xf32>
    %9 = vector.shape_cast %8 : vector<8xf32> to vector<8x1xf32>
    %cst_3 = arith.constant 3.200000e+01 : f32
    %10 = vector.broadcast %cst_3 : f32 to vector<8x1xf32>
    %11 = arith.divf %9, %10 : vector<8x1xf32>
    %cst_4 = arith.constant 9.99999974E-6 : f32
    %12 = vector.broadcast %cst_4 : f32 to vector<8x1xf32>
    %13 = arith.addf %11, %12 : vector<8x1xf32>
    %14 = math.rsqrt %13 : vector<8x1xf32>
    %15 = vector.broadcast %14 : vector<8x1xf32> to vector<8x32xf32>
    %16 = arith.mulf %6, %15 : vector<8x32xf32>
    %c0_5 = arith.constant 0 : index
    %c0_6 = arith.constant 0 : index
    %17 = vector.load %arg2[%c0_5, %c0_6] : memref<1x32xf32, #tpu.memory_space<vmem>>, vector<1x32xf32>
    %18 = vector.broadcast %17 : vector<1x32xf32> to vector<8x32xf32>
    %19 = arith.mulf %16, %18 : vector<8x32xf32>
    %c0_7 = arith.constant 0 : index
    %c0_8 = arith.constant 0 : index
    %20 = vector.load %arg3[%c0_7, %c0_8] : memref<1x32xf32, #tpu.memory_space<vmem>>, vector<1x32xf32>
    %21 = vector.broadcast %20 : vector<1x32xf32> to vector<8x32xf32>
    %22 = arith.addf %19, %21 : vector<8x32xf32>
    %23 = arith.truncf %22 : vector<8x32xf32> to vector<8x32xbf16>
    %c0_9 = arith.constant 0 : index
    %c0_10 = arith.constant 0 : index
    %24 = vector.load %arg4[%c0_9, %c0_10] : memref<32x128xbf16, #tpu.memory_space<vmem>>, vector<32x128xbf16>
    %cst_11 = arith.constant dense<0.000000e+00> : vector<8x128xf32>
    %25 = tpu.matmul %23, %24, %cst_11 {dimension_numbers = #tpu.dot_dimension_numbers<[1], [0], [0], [1], [0, 0, 1, 1], [], []>} : vector<8x32xbf16>, vector<32x128xbf16>, vector<8x128xf32> -> vector<8x128xf32>
    %c0_12 = arith.constant 0 : index
    %c0_13 = arith.constant 0 : index
    %26 = vector.load %arg5[%c0_12, %c0_13] : memref<1x128xf32, #tpu.memory_space<vmem>>, vector<1x128xf32>
    %27 = vector.broadcast %26 : vector<1x128xf32> to vector<8x128xf32>
    %28 = arith.addf %25, %27 : vector<8x128xf32>
    %cst_14 = arith.constant 5.000000e-01 : f32
    %29 = vector.broadcast %cst_14 : f32 to vector<8x128xf32>
    %30 = arith.mulf %29, %28 : vector<8x128xf32>
    %31 = arith.mulf %28, %28 : vector<8x128xf32>
    %32 = arith.mulf %31, %28 : vector<8x128xf32>
    %cst_15 = arith.constant 4.471500e-02 : f32
    %33 = vector.broadcast %cst_15 : f32 to vector<8x128xf32>
    %34 = arith.mulf %33, %32 : vector<8x128xf32>
    %35 = arith.addf %28, %34 : vector<8x128xf32>
    %cst_16 = arith.constant 0.797884583 : f32
    %36 = vector.broadcast %cst_16 : f32 to vector<8x128xf32>
    %37 = arith.mulf %36, %35 : vector<8x128xf32>
    %38 = math.tanh %37 : vector<8x128xf32>
    %cst_17 = arith.constant 1.000000e+00 : f32
    %39 = vector.broadcast %cst_17 : f32 to vector<8x128xf32>
    %40 = arith.addf %39, %38 : vector<8x128xf32>
    %41 = arith.mulf %30, %40 : vector<8x128xf32>
    %42 = arith.truncf %41 : vector<8x128xf32> to vector<8x128xbf16>
    %c0_18 = arith.constant 0 : index
    %c0_19 = arith.constant 0 : index
    %43 = vector.load %arg6[%c0_18, %c0_19] : memref<128x32xbf16, #tpu.memory_space<vmem>>, vector<128x32xbf16>
    %cst_20 = arith.constant dense<0.000000e+00> : vector<8x32xf32>
    %44 = tpu.matmul %42, %43, %cst_20 {dimension_numbers = #tpu.dot_dimension_numbers<[1], [0], [0], [1], [0, 0, 1, 1], [], []>} : vector<8x128xbf16>, vector<128x32xbf16>, vector<8x32xf32> -> vector<8x32xf32>
    %c0_21 = arith.constant 0 : index
    %c0_22 = arith.constant 0 : index
    %45 = vector.load %arg7[%c0_21, %c0_22] : memref<1x32xf32, #tpu.memory_space<vmem>>, vector<1x32xf32>
    %46 = vector.broadcast %45 : vector<1x32xf32> to vector<8x32xf32>
    %47 = arith.addf %44, %46 : vector<8x32xf32>
    %48 = arith.addf %0, %47 : vector<8x32xf32>
    %c0_23 = arith.constant 0 : index
    %c0_24 = arith.constant 0 : index
    %49 = vector.load %arg8[%c0_23, %c0_24] : memref<8x32xf32, #tpu.memory_space<vmem>>, vector<8x32xf32>
    tpu.vector_store %arg8[%c0_23, %c0_24], %48 {strides = array<i32>} : memref<8x32xf32, #tpu.memory_space<vmem>>, vector<8x32xf32>,
    return
  }
  func.func @transform_0(%arg0: i32) -> (i32, i32) {
    %c0_i32 = arith.constant 0 : i32
    %c0_i32_0 = arith.constant 0 : i32
    return %arg0, %c0_i32 : i32, i32
  }
  func.func @transform_1(%arg0: i32) -> (i32, i32) {
    %c0_i32 = arith.constant 0 : i32
    %c0_i32_0 = arith.constant 0 : i32
    %c0_i32_1 = arith.constant 0 : i32
    return %c0_i32, %c0_i32_0 : i32, i32
  }
  func.func @transform_2(%arg0: i32) -> (i32, i32) {
    %c0_i32 = arith.constant 0 : i32
    %c0_i32_0 = arith.constant 0 : i32
    %c0_i32_1 = arith.constant 0 : i32
    return %c0_i32, %c0_i32_0 : i32, i32
  }
  func.func @transform_3(%arg0: i32) -> (i32, i32) {
    %c0_i32 = arith.constant 0 : i32
    %c0_i32_0 = arith.constant 0 : i32
    %c0_i32_1 = arith.constant 0 : i32
    return %c0_i32, %c0_i32_0 : i32, i32
  }
  func.func @transform_4(%arg0: i32) -> (i32, i32) {
    %c0_i32 = arith.constant 0 : i32
    %c0_i32_0 = arith.constant 0 : i32
    %c0_i32_1 = arith.constant 0 : i32
    return %c0_i32, %c0_i32_0 : i32, i32
  }
  func.func @transform_5(%arg0: i32) -> (i32, i32) {
    %c0_i32 = arith.constant 0 : i32
    %c0_i32_0 = arith.constant 0 : i32
    %c0_i32_1 = arith.constant 0 : i32
    return %c0_i32, %c0_i32_0 : i32, i32
  }
  func.func @transform_6(%arg0: i32) -> (i32, i32) {
    %c0_i32 = arith.constant 0 : i32
    %c0_i32_0 = arith.constant 0 : i32
    %c0_i32_1 = arith.constant 0 : i32
    return %c0_i32, %c0_i32_0 : i32, i32
  }
  func.func @transform_7(%arg0: i32) -> (i32, i32) {
    %c0_i32 = arith.constant 0 : i32
    %c0_i32_0 = arith.constant 0 : i32
    return %arg0, %c0_i32 : i32, i32
  }
}

</mosaic_0001>

<llo_original>
// kernel: tpu_custom_call.1
$region0: #{tpu_custom_call.1}
  #allocation0 [shape = 'u32[]', space=smem, size = 0x4, offset = 0x4, fixed_abs, tag = 'smem constant byte address 0x4 - core index']
  #allocation1 [shape = 'u32[72,128]{1,0:T(1,128)}', space=vmem, size = 0x9000, scoped, tag = 'internal scratch']
  %s0 = inlined_call_operand.vmem [shape: f32[16,32], index: 0, kind: input, shape index: {}]
  %s1 = inlined_call_operand.vmem [shape: f32[1,32], index: 1, kind: input, shape index: {}]
  %s2 = inlined_call_operand.vmem [shape: f32[1,32], index: 2, kind: input, shape index: {}]
  %s3 = inlined_call_operand.vmem [shape: bf16[32,128], index: 3, kind: input, shape index: {}]
  %s4 = inlined_call_operand.vmem [shape: f32[1,128], index: 4, kind: input, shape index: {}]
  %s5 = inlined_call_operand.vmem [shape: bf16[128,32], index: 5, kind: input, shape index: {}]
  %s6 = inlined_call_operand.vmem [shape: f32[1,32], index: 6, kind: input, shape index: {}]
  %s7 = inlined_call_operand.hbm [shape: f32[16,32], index: 7, kind: output, shape index: {}]
  %s8 = sld [smem:[#allocation0]]
  $region61: #{tpu_custom_call.1} parent=0
    _
  %s10 = ssub.s32 1, %s8
  %s11 = scalar_select 0, %s10, %s8
  $region1: #{tpu_custom_call.1} parent=0
    #allocation2 [shape = 'u8[8192]{0}', space=vmem, size = 0x2000, scoped, tag = 'output window, operand 0']
    #allocation3 [shape = 's32[2]{0}', space=sflag, size = 0x8, scoped, tag = 'scoped memory for tpu_custom_call.1']
    %12 = vsyncpa [#allocation3], 0
    %s13 = scalar_lea.sflag [#allocation3], 1
    %14 = vsyncpa %s13, 0
    loop: start=0, step=1, limit=4
    $region2: #{tpu_custom_call.1} parent=1 // loop_pre_header
      _
    $region3: #{tpu_custom_call.1} parent=1 // loop_header
      %s16 = sphi 0, %s20
      %p17 = scmp.ge.s32.totalorder %s16, 4
      %s26 = sphi 0, %s28
      %s29 = sphi 0, %s26
      %s30 = sphi 0, %s29
      %s46 = sphi 0, %s30
      %s50 = sphi 0, %s50
      %s52 = sphi 0, %s50
      %s53 = sphi 0, %s52
      %s67 = sphi 0, %s53
      %s71 = sphi 0, %s71
      %s73 = sphi 0, %s71
      %s74 = sphi 0, %s73
      %s88 = sphi 0, %s74
      %s92 = sphi 0, %s92
      %s94 = sphi 0, %s92
      %s95 = sphi 0, %s94
      %s109 = sphi 0, %s95
      %s113 = sphi 0, %s113
      %s115 = sphi 0, %s113
      %s116 = sphi 0, %s115
      %s130 = sphi 0, %s116
      %s134 = sphi 0, %s134
      %s136 = sphi 0, %s134
      %s137 = sphi 0, %s136
      %s151 = sphi 0, %s137
      %s155 = sphi 0, %s155
      %s157 = sphi 0, %s155
      %s158 = sphi 0, %s157
      %s172 = sphi 0, %s158
      %s178 = sphi 0, %s180
      %s181 = sphi 0, %s178
      %s182 = sphi 0, %s181
      %s198 = sphi 0, %s182
    $region4: #{tpu_custom_call.1} parent=1 // loop_header_branch
      %19 = sbr.rel (%p17) target = $region8
    $region5: #{tpu_custom_call.1} parent=1 // loop_body
      %s21 = ssub.s32 %s16, 1
      %s22 = ssub.s32 %s16, 2
      %s23 = sadd.s32 %s16, 1
      %s24 = ssub.s32 %s16, %s23
      %p25 = scmp.eq.s32.totalorder %s24, 0
      %s27 = sadd.s32 %s26, 1
      %s28 = scalar_select %p25, %s26, %s27
      %p31 = pneg %p25
      %p32 = scmp.eq.s32.totalorder %s16, 1
      %p33 = por %p31, %p32
      %p34 = scmp.ne.s32.totalorder %s26, %s29
      %p35 = scmp.eq.s32.totalorder %s16, 0
      %p36 = por %p34, %p35
      %p37 = scmp.ne.s32.totalorder %s26, %s29
      %p38 = scmp.eq.s32.totalorder %s21, 1
      %p39 = por %p37, %p38
      %p40 = scmp.ne.s32.totalorder %s29, %s30
      %p41 = scmp.eq.s32.totalorder %s21, 0
      %p42 = por %p40, %p41
      %p43 = scmp.ne.s32.totalorder %s29, %s30
      %p44 = scmp.eq.s32.totalorder %s22, 1
      %p45 = por %p43, %p44
      %p47 = scmp.ne.s32.totalorder %s30, %s46
      %p48 = scmp.eq.s32.totalorder %s22, 0
      %p49 = por %p47, %p48
      %s51 = sadd.s32 %s50, 1
      %p54 = scmp.eq.s32.totalorder %s16, 1
      %p55 = scmp.ne.s32.totalorder %s50, %s52
      %p56 = scmp.eq.s32.totalorder %s16, 0
      %p57 = por %p55, %p56
      %p58 = scmp.ne.s32.totalorder %s50, %s52
      %p59 = scmp.eq.s32.totalorder %s21, 1
      %p60 = por %p58, %p59
      %p61 = scmp.ne.s32.totalorder %s52, %s53
      %p62 = scmp.eq.s32.totalorder %s21, 0
      %p63 = por %p61, %p62
      %p64 = scmp.ne.s32.totalorder %s52, %s53
      %p65 = scmp.eq.s32.totalorder %s22, 1
      %p66 = por %p64, %p65
      %p68 = scmp.ne.s32.totalorder %s53, %s67
      %p69 = scmp.eq.s32.totalorder %s22, 0
      %p70 = por %p68, %p69
      %s72 = sadd.s32 %s71, 1
      %p75 = scmp.eq.s32.totalorder %s16, 1
      %p76 = scmp.ne.s32.totalorder %s71, %s73
      %p77 = scmp.eq.s32.totalorder %s16, 0
      %p78 = por %p76, %p77
      %p79 = scmp.ne.s32.totalorder %s71, %s73
      %p80 = scmp.eq.s32.totalorder %s21, 1
      %p81 = por %p79, %p80
      %p82 = scmp.ne.s32.totalorder %s73, %s74
      %p83 = scmp.eq.s32.totalorder %s21, 0
      %p84 = por %p82, %p83
      %p85 = scmp.ne.s32.totalorder %s73, %s74
      %p86 = scmp.eq.s32.totalorder %s22, 1
      %p87 = por %p85, %p86
      %p89 = scmp.ne.s32.totalorder %s74, %s88
      %p90 = scmp.eq.s32.totalorder %s22, 0
      %p91 = por %p89, %p90
      %s93 = sadd.s32 %s92, 1
      %p96 = scmp.eq.s32.totalorder %s16, 1
      %p97 = scmp.ne.s32.totalorder %s92, %s94
      %p98 = scmp.eq.s32.totalorder %s16, 0
      %p99 = por %p97, %p98
      %p100 = scmp.ne.s32.totalorder %s92, %s94
      %p101 = scmp.eq.s32.totalorder %s21, 1
      %p102 = por %p100, %p101
      %p103 = scmp.ne.s32.totalorder %s94, %s95
      %p104 = scmp.eq.s32.totalorder %s21, 0
      %p105 = por %p103, %p104
      %p106 = scmp.ne.s32.totalorder %s94, %s95
      %p107 = scmp.eq.s32.totalorder %s22, 1
      %p108 = por %p106, %p107
      %p110 = scmp.ne.s32.totalorder %s95, %s109
      %p111 = scmp.eq.s32.totalorder %s22, 0
      %p112 = por %p110, %p111
      %s114 = sadd.s32 %s113, 1
      %p117 = scmp.eq.s32.totalorder %s16, 1
      %p118 = scmp.ne.s32.totalorder %s113, %s115
      %p119 = scmp.eq.s32.totalorder %s16, 0
      %p120 = por %p118, %p119
      %p121 = scmp.ne.s32.totalorder %s113, %s115
      %p122 = scmp.eq.s32.totalorder %s21, 1
      %p123 = por %p121, %p122
      %p124 = scmp.ne.s32.totalorder %s115, %s116
      %p125 = scmp.eq.s32.totalorder %s21, 0
      %p126 = por %p124, %p125
      %p127 = scmp.ne.s32.totalorder %s115, %s116
      %p128 = scmp.eq.s32.totalorder %s22, 1
      %p129 = por %p127, %p128
      %p131 = scmp.ne.s32.totalorder %s116, %s130
      %p132 = scmp.eq.s32.totalorder %s22, 0
      %p133 = por %p131, %p132
      %s135 = sadd.s32 %s134, 1
      %p138 = scmp.eq.s32.totalorder %s16, 1
      %p139 = scmp.ne.s32.totalorder %s134, %s136
      %p140 = scmp.eq.s32.totalorder %s16, 0
      %p141 = por %p139, %p140
      %p142 = scmp.ne.s32.totalorder %s134, %s136
      %p143 = scmp.eq.s32.totalorder %s21, 1
      %p144 = por %p142, %p143
      %p145 = scmp.ne.s32.totalorder %s136, %s137
      %p146 = scmp.eq.s32.totalorder %s21, 0
      %p147 = por %p145, %p146
      %p148 = scmp.ne.s32.totalorder %s136, %s137
      %p149 = scmp.eq.s32.totalorder %s22, 1
      %p150 = por %p148, %p149
      %p152 = scmp.ne.s32.totalorder %s137, %s151
      %p153 = scmp.eq.s32.totalorder %s22, 0
      %p154 = por %p152, %p153
      %s156 = sadd.s32 %s155, 1
      %p159 = scmp.eq.s32.totalorder %s16, 1
      %p160 = scmp.ne.s32.totalorder %s155, %s157
      %p161 = scmp.eq.s32.totalorder %s16, 0
      %p162 = por %p160, %p161
      %p163 = scmp.ne.s32.totalorder %s155, %s157
      %p164 = scmp.eq.s32.totalorder %s21, 1
      %p165 = por %p163, %p164
      %p166 = scmp.ne.s32.totalorder %s157, %s158
      %p167 = scmp.eq.s32.totalorder %s21, 0
      %p168 = por %p166, %p167
      %p169 = scmp.ne.s32.totalorder %s157, %s158
      %p170 = scmp.eq.s32.totalorder %s22, 1
      %p171 = por %p169, %p170
      %p173 = scmp.ne.s32.totalorder %s158, %s172
      %p174 = scmp.eq.s32.totalorder %s22, 0
      %p175 = por %p173, %p174
      %s176 = ssub.s32 %s16, %s23
      %p177 = scmp.eq.s32.totalorder %s176, 0
      %s179 = sadd.s32 %s178, 1
      %s180 = scalar_select %p177, %s178, %s179
      %p183 = pneg %p177
      %p184 = scmp.eq.s32.totalorder %s16, 1
      %p185 = por %p183, %p184
      %p186 = scmp.ne.s32.totalorder %s178, %s181
      %p187 = scmp.eq.s32.totalorder %s16, 0
      %p188 = por %p186, %p187
      %p189 = scmp.ne.s32.totalorder %s178, %s181
      %p190 = scmp.eq.s32.totalorder %s21, 1
      %p191 = por %p189, %p190
      %p192 = scmp.ne.s32.totalorder %s181, %s182
      %p193 = scmp.eq.s32.totalorder %s21, 0
      %p194 = por %p192, %p193
      %p195 = scmp.ne.s32.totalorder %s181, %s182
      %p196 = scmp.eq.s32.totalorder %s22, 1
      %p197 = por %p195, %p196
      %p199 = scmp.ne.s32.totalorder %s182, %s198
      %p200 = scmp.eq.s32.totalorder %s22, 0
      %p201 = por %p199, %p200
      %p202 = scmp.le.s32.totalorder 1, %s16
      %p203 = scmp.lt.s32.totalorder %s16, 3
      %p204 = pnand %p202, %p203
      %p205 = pneg %p204
      // Predicated region
      $region9: #{tpu_custom_call.1} parent=5 // pred_check
        _
      $region10: #{tpu_custom_call.1} parent=5 // pred_check_branch
        %207 = sbr.rel (%p204) target = $region12
      $region11: #{tpu_custom_call.1} parent=5 // pred_region
        %s208 = ssub.s32 %s16, 1
        // Predicated region
        $region13: #{tpu_custom_call.1} parent=11 // pred_check
          %p209 = pneg %p63
        $region14: #{tpu_custom_call.1} parent=11 // pred_check_branch
          %211 = sbr.rel (%p209) target = $region16
        $region15: #{tpu_custom_call.1} parent=11 // pred_region
          _
        $region16: #{tpu_custom_call.1} parent=11 // pred_fallthru
          _
        // Predicated region
        $region17: #{tpu_custom_call.1} parent=11 // pred_check
          %p212 = pneg %p84
        $region18: #{tpu_custom_call.1} parent=11 // pred_check_branch
          %214 = sbr.rel (%p212) target = $region20
        $region19: #{tpu_custom_call.1} parent=11 // pred_region
          _
        $region20: #{tpu_custom_call.1} parent=11 // pred_fallthru
          _
        // Predicated region
        $region21: #{tpu_custom_call.1} parent=11 // pred_check
          %p215 = pneg %p105
        $region22: #{tpu_custom_call.1} parent=11 // pred_check_branch
          %217 = sbr.rel (%p215) target = $region24
        $region23: #{tpu_custom_call.1} parent=11 // pred_region
          _
        $region24: #{tpu_custom_call.1} parent=11 // pred_fallthru
          _
        // Predicated region
        $region25: #{tpu_custom_call.1} parent=11 // pred_check
          %p218 = pneg %p126
        $region26: #{tpu_custom_call.1} parent=11 // pred_check_branch
          %220 = sbr.rel (%p218) target = $region28
        $region27: #{tpu_custom_call.1} parent=11 // pred_region
          _
        $region28: #{tpu_custom_call.1} parent=11 // pred_fallthru
          _
        // Predicated region
        $region29: #{tpu_custom_call.1} parent=11 // pred_check
          %p221 = pneg %p147
        $region30: #{tpu_custom_call.1} parent=11 // pred_check_branch
          %223 = sbr.rel (%p221) target = $region32
        $region31: #{tpu_custom_call.1} parent=11 // pred_region
          _
        $region32: #{tpu_custom_call.1} parent=11 // pred_fallthru
          _
        // Predicated region
        $region33: #{tpu_custom_call.1} parent=11 // pred_check
          %p224 = pneg %p168
        $region34: #{tpu_custom_call.1} parent=11 // pred_check_branch
          %226 = sbr.rel (%p224) target = $region36
        $region35: #{tpu_custom_call.1} parent=11 // pred_region
          _
        $region36: #{tpu_custom_call.1} parent=11 // pred_fallthru
          _
      $region12: #{tpu_custom_call.1} parent=5 // pred_fallthru
        _
      %p227 = scmp.lt.s32.totalorder %s16, 2
      // Predicated region
      $region37: #{tpu_custom_call.1} parent=5 // pred_check
        %p228 = pneg %p227
      $region38: #{tpu_custom_call.1} parent=5 // pred_check_branch
        %230 = sbr.rel (%p228) target = $region40
      $region39: #{tpu_custom_call.1} parent=5 // pred_region
        // Predicated region
        $region41: #{tpu_custom_call.1} parent=39 // pred_check
          %p231 = pneg %p36
        $region42: #{tpu_custom_call.1} parent=39 // pred_check_branch
          %233 = sbr.rel (%p231) target = $region44
        $region43: #{tpu_custom_call.1} parent=39 // pred_region
          %p234 = scmp.lt.s32.totalorder %s16, 1
          %s235 = scalar_select %p234, %s16, 1
          %s236 = smul.addr %s235, 8
          %s237 = scalar_lea.vmem %s0, %s236
        $region44: #{tpu_custom_call.1} parent=39 // pred_fallthru
          _
      $region40: #{tpu_custom_call.1} parent=5 // pred_fallthru
        _
      %p238 = scmp.le.s32.totalorder 1, %s16
      %p239 = scmp.lt.s32.totalorder %s16, 3
      %p240 = pnand %p238, %p239
      %p241 = pneg %p240
      // Predicated region
      $region45: #{tpu_custom_call.1} parent=5 // pred_check
        _
      $region46: #{tpu_custom_call.1} parent=5 // pred_check_branch
        %243 = sbr.rel (%p240) target = $region48
      $region47: #{tpu_custom_call.1} parent=5 // pred_region
        %s244 = ssub.s32 %s16, 1
        %p245 = scmp.lt.s32.totalorder %s21, 1
        %s246 = scalar_select %p245, %s21, 1
        %s247 = smul.addr %s246, 8
        %s248 = scalar_lea.vmem %s0, %s247
        %p249 = pneg %p42
        %p250 = pneg %p39
        %p251 = pneg %p63
        %p252 = pneg %p60
        %p253 = pneg %p84
        %p254 = pneg %p81
        %p255 = pneg %p105
        %p256 = pneg %p102
        %p257 = pneg %p126
        %p258 = pneg %p123
        %p259 = pneg %p147
        %p260 = pneg %p144
        %p261 = pneg %p168
        %p262 = pneg %p165
        %p263 = pneg %p194
        %p264 = pneg %p191
        %s265 = sand.u32 %s181, 1
        %s266 = scalar_lea.sflag [#allocation3], %s265
        %s267 = sand.u32 %s181, 1
        %s268 = smul.addr %s267, 8
        %s269 = scalar_lea.vmem [#allocation2], %s268
        %p270 = scmp.lt.s32.totalorder %s21, 1
        %s271 = scalar_select %p270, %s21, 1
        %s272 = smul.addr %s271, 8
        %s273 = scalar_lea.vmem %s0, %s272
        %v275 = vld [vmem:[%s273] sm:$0xff]
        %vm276 = vcmask 261120
        %v277 = vsel %vm276, %v275, 0.0
        %278 = vadd.xlane.f32.xlu0 %v277
        %v279 = vpop.xlane.xlu0 %278
        %v280 = vrcp.pop 32.0
        %v281 = vmul.f32 32.0, %v280
        %v282 = vsub.f32 1.0, %v281
        %v283 = vmul.f32 %v280, %v282
        %v284 = vadd.f32 %v280, %v283
        %vm285 = vweird.f32 %v280
        %v286 = vsel %vm285, %v280, %v284
        %v287 = vmul.f32 %v279, %v286
        %v288 = vsub.f32 %v275, %v287
        %v289 = vmul.f32 %v288, %v288
        %v290 = vsel %vm276, %v289, 0.0
        %291 = vadd.xlane.f32.xlu0 %v290
        %v292 = vpop.xlane.xlu0 %291
        %v293 = vmul.f32 %v292, %v286
        %v294 = vadd.f32 %v293, 1e-05
        %v295 = vrsqrt.pop %v294
        %v296 = vmul.f32 %v295, %v294
        %v297 = vmul.f32 %v296, %v295
        %v298 = vmul.f32 0.5, %v297
        %v299 = vsub.f32 1.5, %v298
        %v300 = vmul.f32 %v295, %v299
        %vm301 = vweird.f32 %v294
        %vm302 = vweird.f32 %v295
        %vm303 = vmor %vm301, %vm302
        %v304 = vsel %vm303, %v295, %v300
        %v305 = vmul.f32 %v288, %v304
        %v306 = vld [vmem:[%s1] sm:$0x1]
        %v308 = vperm.slane %v306, 0
        %v310 = vmul.f32 %v305, %v308
        %v311 = vld [vmem:[%s2] sm:$0x1]
        %v313 = vperm.slane %v311, 0
        %v315 = vadd.f32 %v310, %v313
        %v316 = vpack.c.bf16 %v315, %v315
        %v317 = vld [vmem:[%s3] sm:$0xf]
        %v318 = vld [vmem:[%s3 + $0x4] sm:$0xf]
        %v319 = vld [vmem:[%s3 + $0x8] sm:$0xf]
        %v320 = vld [vmem:[%s3 + $0xc] sm:$0xf]
        %v321 = vld [vmem:[%s4] sm:$0x1]
        %v323 = vperm.slane %v321, 0
        %v329 = vunpack.c.l.b16 %v317
        %v330 = vunpack.c.l.b16 %v318
        %v331 = vunpack.c.l.b16 %v319
        %v332 = vunpack.c.l.b16 %v320
        %v333 = vpack.c.b16 %v330, %v329
        %v334 = vpack.c.b16 %v332, %v331
        %v338 = vsel %vm276, %v316, 0
        %340 = vmatpush.bf16.msra.mxu0 0
        %341 = vmatpush.bf16.msra.mxu0 0
        %342 = vmatpush.bf16.msra.mxu0 0
        %343 = vmatpush.bf16.msra.mxu0 0
        %344 = vmatpush.bf16.msra.mxu0 0
        %345 = vmatpush.bf16.msra.mxu0 0
        %346 = vmatpush.bf16.msra.mxu0 %v334
        %347 = vmatpush.bf16.msra.mxu0 %v333
        %348 = vmatmul.bf16.gmra.mxu0 %v338
        %v349 = vpop.f32.mrf.mxu0
        %v350 = vadd.f32 %v323, %v349
        %v351 = vpop.f32.mrf.mxu0
        %352 = vdwg.mxu0
        %v353 = vmul.f32 %v350, 0.5
        %v354 = vmul.f32 %v350, %v350
        %v355 = vmul.f32 %v354, %v350
        %v356 = vmul.f32 %v355, 0.044715
        %v357 = vadd.f32 %v350, %v356
        %v358 = vmul.f32 %v357, 0.7978846
        %v359 = vtanh.pop %v358
        %v360 = vadd.f32 %v359, 1.0
        %v361 = vmul.f32 %v353, %v360
        %v362 = vpack.c.bf16 %v361, %v361
        %v363 = vld [vmem:[%s5] sm:$0xf]
        %v364 = vld [vmem:[%s5 + $0x4] sm:$0xf]
        %v365 = vld [vmem:[%s5 + $0x8] sm:$0xf]
        %v366 = vld [vmem:[%s5 + $0xc] sm:$0xf]
        %v367 = vld [vmem:[%s5 + $0x10] sm:$0xf]
        %v368 = vld [vmem:[%s5 + $0x14] sm:$0xf]
        %v369 = vld [vmem:[%s5 + $0x18] sm:$0xf]
        %v370 = vld [vmem:[%s5 + $0x1c] sm:$0xf]
        %v371 = vld [vmem:[%s5 + $0x20] sm:$0xf]
        %v372 = vld [vmem:[%s5 + $0x24] sm:$0xf]
        %v373 = vld [vmem:[%s5 + $0x28] sm:$0xf]
        %v374 = vld [vmem:[%s5 + $0x2c] sm:$0xf]
        %v375 = vld [vmem:[%s5 + $0x30] sm:$0xf]
        %v376 = vld [vmem:[%s5 + $0x34] sm:$0xf]
        %v377 = vld [vmem:[%s5 + $0x38] sm:$0xf]
        %v378 = vld [vmem:[%s5 + $0x3c] sm:$0xf]
        %v379 = vld [vmem:[%s6] sm:$0x1]
        %v381 = vperm.slane %v379, 0
        %v399 = vunpack.c.l.b16 %v363
        %v400 = vunpack.c.l.b16 %v364
        %v401 = vunpack.c.l.b16 %v365
        %v402 = vunpack.c.l.b16 %v366
        %v403 = vunpack.c.l.b16 %v367
        %v404 = vunpack.c.l.b16 %v368
        %v405 = vunpack.c.l.b16 %v369
        %v406 = vunpack.c.l.b16 %v370
        %v407 = vunpack.c.l.b16 %v371
        %v408 = vunpack.c.l.b16 %v372
        %v409 = vunpack.c.l.b16 %v373
        %v410 = vunpack.c.l.b16 %v374
        %v411 = vunpack.c.l.b16 %v375
        %v412 = vunpack.c.l.b16 %v376
        %v413 = vunpack.c.l.b16 %v377
        %v414 = vunpack.c.l.b16 %v378
        %v415 = vpack.c.b16 %v400, %v399
        %v416 = vpack.c.b16 %v402, %v401
        %v417 = vpack.c.b16 %v404, %v403
        %v418 = vpack.c.b16 %v406, %v405
        %v419 = vpack.c.b16 %v408, %v407
        %v420 = vpack.c.b16 %v410, %v409
        %v421 = vpack.c.b16 %v412, %v411
        %v422 = vpack.c.b16 %v414, %v413
        %431 = vmatpush.bf16.msra.mxu0 %v422
        %432 = vmatpush.bf16.msra.mxu0 %v421
        %433 = vmatpush.bf16.msra.mxu0 %v420
        %434 = vmatpush.bf16.msra.mxu0 %v419
        %435 = vmatpush.bf16.msra.mxu0 %v418
        %436 = vmatpush.bf16.msra.mxu0 %v417
        %437 = vmatpush.bf16.msra.mxu0 %v416
        %438 = vmatpush.bf16.msra.mxu0 %v415
        %439 = vmatmul.bf16.gmra.mxu0 %v362
        %v440 = vpop.f32.mrf.mxu0
        %v441 = vadd.f32 %v381, %v440
        %v442 = vpop.f32.mrf.mxu0
        %443 = vdwg.mxu0
        %v444 = vadd.f32 %v275, %v441
        %445 = vst.msk [vmem:[%s269] sm:$0xff] %vm276, %v444
        %s446 = sand.u32 %s181, 1
        %s447 = scalar_lea.sflag [#allocation3], %s446
        %s448 = sand.u32 %s181, 1
        %s449 = smul.addr %s448, 8
        %s450 = scalar_lea.vmem [#allocation2], %s449
        // Predicated region
        $region49: #{tpu_custom_call.1} parent=47 // pred_check
          %p451 = pneg %p191
        $region50: #{tpu_custom_call.1} parent=47 // pred_check_branch
          %453 = sbr.rel (%p451) target = $region52
        $region51: #{tpu_custom_call.1} parent=47 // pred_region
          %455 = vsyncadd %s447, 0
          %s456 = smul.addr %s21, 8
          %s457 = scalar_lea.hbm %s7, %s456
          %s459 = sshll.u32 %s450, 4
          %s460 = int_to_ptr.vmem [resolvable:$true] %s459
          %s461 = sshll.u32 %s457, 4
          %s462 = int_to_ptr.hbm [resolvable:$true] %s461
          %464 = dma.vmem_to_hbm [thread:$0]  %s460, 128, %s462, %s447
        $region52: #{tpu_custom_call.1} parent=47 // pred_fallthru
          _
      $region48: #{tpu_custom_call.1} parent=5 // pred_fallthru
        _
      %p465 = scmp.le.s32.totalorder 2, %s16
      // Predicated region
      $region53: #{tpu_custom_call.1} parent=5 // pred_check
        %p466 = pneg %p465
      $region54: #{tpu_custom_call.1} parent=5 // pred_check_branch
        %468 = sbr.rel (%p466) target = $region56
      $region55: #{tpu_custom_call.1} parent=5 // pred_region
        %s469 = ssub.s32 %s16, 2
        // Predicated region
        $region57: #{tpu_custom_call.1} parent=55 // pred_check
          %p470 = pneg %p197
        $region58: #{tpu_custom_call.1} parent=55 // pred_check_branch
          %472 = sbr.rel (%p470) target = $region60
        $region59: #{tpu_custom_call.1} parent=55 // pred_region
          %s473 = sand.u32 %s182, 1
          %s474 = scalar_lea.sflag [#allocation3], %s473
          %s475 = sand.u32 %s182, 1
          %s476 = smul.addr %s475, 8
          %s477 = scalar_lea.vmem [#allocation2], %s476
          %479 = dma.done %s474, 128
        $region60: #{tpu_custom_call.1} parent=55 // pred_fallthru
          _
      $region56: #{tpu_custom_call.1} parent=5 // pred_fallthru
        _
    $region6: #{tpu_custom_call.1} parent=1 // loop_footer
      %s20 = sadd.s32 1, %s16
    $region7: #{tpu_custom_call.1} parent=1 // loop_footer_branch
      %15 = sbr.rel target = $region3
    $region8: #{tpu_custom_call.1} parent=1 // loop_exit
      _
    %480 = vsyncpa [#allocation3], 1
    %s481 = scalar_lea.sflag [#allocation3], 1
    %482 = vsyncpa %s481, 1

</llo_original>
